<compile_context>
chip_gen: v5e
topology: v5e:2x2
jax: 0.10.0
libtpu: 0.0.40
codegen_flags: <defaults>
</compile_context>

<pallas_src>
import functools
import math

import numpy as np
import jax
import jax.numpy as jnp
from jax import lax
from jax.experimental import pallas as pl
from jax.experimental.pallas import tpu as pltpu


# --------------------------- model spec / schedule ------------------------- #

def build_model_spec(*, n_conv_layers, in_channels, hidden_channels,
                     out_channels, n_block_layers, padding_mode):
    """Static (trace-time) layer schedule mirroring REDENTnopooling.forward.

    Returns (schedule, layer_shapes):
      schedule ops:
        ("conv", layer_idx, circular_pad, apply_relu)
        ("save", slot)   -- stash current activation (encoder block output)
        ("add",  slot)   -- skip-connection add
      layer_shapes: list of (cin, cout) per conv layer, in schedule order.
    """
    N = n_conv_layers
    circ = (padding_mode == "circular")
    sched, layer_shapes = [], []

    def conv(cin, cout, circular, relu):
        li = len(layer_shapes)
        layer_shapes.append((cin, cout))
        sched.append(("conv", li, circular, relu))

    # Encoder ("conv_downsample")
    for i in range(N):
        cin = in_channels if i == 0 else hidden_channels[i - 1]
        conv(cin, hidden_channels[i], circ, True)
        for _ in range(n_block_layers):
            conv(hidden_channels[i], hidden_channels[i], circ, True)
        sched.append(("save", i))

    # Decoder ("conv_upsample")
    for i in range(N):
        if i > 0:
            sched.append(("add", N - 1 - i))
        if i < N - 1:
            cin = hidden_channels[N - 1 - i]
            cmid = hidden_channels[N - 1 - (i + 1)]
            conv(cin, cmid, True, True)              # hard-coded circular pad
            for _ in range(n_block_layers):
                conv(cmid, cmid, circ, True)
        else:
            c = hidden_channels[N - 1 - i]
            for _ in range(n_block_layers):
                conv(c, c, circ, True)
            conv(c, out_channels, False, False)      # zeros pad, no activation
    return sched, layer_shapes


# ----------------------- parameter init & packing -------------------------- #

def _init_conv(key, cin, cout, ks):
    # PyTorch Conv1d default init (uniform +- 1/sqrt(fan_in)).
    kw, kb = jax.random.split(key)
    bound = 1.0 / math.sqrt(cin * ks)
    w = jax.random.uniform(kw, (cout, cin, ks), jnp.float32, -bound, bound)
    b = jax.random.uniform(kb, (cout,), jnp.float32, -bound, bound)
    return w, b


def pack_weights(layers, Cmax, K):
    """Pack all conv layers into one (n_layers, Cmax, Cmax*K + 1) array.

    packed[li, co, k*Cmax + ci] = w[co, ci, k]; the last column is the bias
    (the kernel appends a row of ones to the im2col operand, so the bias is
    folded into the single MXU matmul). Channels are zero-padded to Cmax so
    every layer has an identical layout; padded channels stay exactly zero.
    Done ONCE at init time — no per-call transposes/reshapes.
    """
    packed = []
    for (w, b) in layers:
        cout, cin, _ = w.shape
        wt = jnp.transpose(w, (0, 2, 1))                      # (Cout, K, Cin)
        wt = jnp.pad(wt, ((0, Cmax - cout), (0, 0), (0, Cmax - cin)))
        wm = wt.reshape(Cmax, K * Cmax)
        bc = jnp.pad(b, (0, Cmax - cout)).reshape(Cmax, 1)
        packed.append(jnp.concatenate([wm, bc], axis=1))
    return jnp.stack(packed).astype(jnp.float32)


# ------------------------------ Pallas kernel ------------------------------ #

def _pad_lanes(x, p, circular):
    # x: (C, L) -> (C, L + 2p), circular wrap or zeros.
    C, L = x.shape
    if p == 0:
        return x
    if circular:
        left, right = x[:, L - p:], x[:, :p]
    else:
        z = jnp.zeros((C, p), x.dtype)
        left = right = z
    return jnp.concatenate([left, x, right], axis=1)


def _fused_kernel(x_ref, w_ref, o_ref, *, sched, Cmax, K, pad, L, out_channels):
    # x_ref : (1, 1, L)                       one batch element (in_channels==1)
    # w_ref : (n_layers, Cmax, Cmax*K + 1)    packed weights (+ bias column)
    # o_ref : (1, out_channels, L)
    ones_row = jnp.ones((1, L), jnp.float32)      # hoisted bias row

    # Channel-pad the input by sublane-broadcast; the extra rows are multiplied
    # by exactly-zero weight columns, so their contents never matter.
    x = jnp.broadcast_to(x_ref[0], (Cmax, L)).astype(jnp.float32)

    saved = {}
    for op in sched:                              # static: fully unrolled
        if op[0] == "conv":
            _, li, circular, relu = op
            xp = _pad_lanes(x, pad, circular)                 # (Cmax, L + 2p)
            cols = [xp[:, k:k + L] for k in range(K)]         # K x (Cmax, L)
            cols.append(ones_row)                             # bias row
            xcol = jnp.concatenate(cols, axis=0)              # (Cmax*K+1, L)
            y = jnp.dot(w_ref[li], xcol,
                        preferred_element_type=jnp.float32)   # (Cmax, L)
            x = jnp.maximum(y, 0.0) if relu else y
        elif op[0] == "save":
            saved[op[1]] = x                                   # stays in VMEM/vregs
        else:  # ("add", slot) — skip connection, fused in-kernel
            x = x + saved[op[1]]

    o_ref[0] = x[:out_channels, :].astype(o_ref.dtype)


def make_forward(*, sched, Cmax, K, padding, L, B, out_channels, n_layers):
    kernel = functools.partial(_fused_kernel, sched=tuple(sched), Cmax=Cmax,
                               K=K, pad=padding, L=L, out_channels=out_channels)

    @jax.jit
    def fwd(x, w_all):
        x3 = x[:, None, :]                        # torch.unsqueeze(x, dim=1)
        y = pl.pallas_call(
            kernel,
            out_shape=jax.ShapeDtypeStruct((B, out_channels, L), jnp.float32),
            grid_spec=pltpu.PrefetchScalarGridSpec(
                num_scalar_prefetch=0,
                grid=(B,),
                in_specs=[
                    pl.BlockSpec((1, 1, L), lambda b: (b, 0, 0)),
                    pl.BlockSpec((n_layers, Cmax, K * Cmax + 1),
                                 lambda b: (0, 0, 0)),
                ],
                out_specs=pl.BlockSpec((1, out_channels, L),
                                       lambda b: (b, 0, 0)),
            ),
            compiler_params=pltpu.CompilerParams(
                dimension_semantics=("parallel",)),   # v7x: one batch per TC
        )(x3, w_all)
        return jnp.squeeze(y)                     # torch.squeeze(x)

    return fwd


# ---------------------- pure-JAX reference for checking -------------------- #

def conv1d_ref(x, w, b, *, padding, circular, apply_relu):
    p = padding
    if circular and p > 0:
        L = x.shape[-1]
        x = jnp.concatenate([x[..., L - p:], x, x[..., :p]], axis=-1)
        pad = "VALID"
    else:
        pad = [(p, p)]
    y = lax.conv_general_dilated(x, w, window_strides=(1,), padding=pad,
                                 dimension_numbers=("NCH", "OIH", "NCH"))
    y = y + b[None, :, None]
    if apply_relu:
        y = jnp.maximum(y, 0.0)
    return y


def forward_ref(x, sched, layers, padding):
    x = x[:, None, :]
    saved = {}
    for op in sched:
        if op[0] == "conv":
            _, li, circ, relu = op
            w, b = layers[li]
            x = conv1d_ref(x, w, b, padding=padding, circular=circ,
                           apply_relu=relu)
        elif op[0] == "save":
            saved[op[1]] = x
        else:
            x = x + saved[op[1]]
    return jnp.squeeze(x)


# ---------------------------------- main ----------------------------------- #

if __name__ == "__main__":
    cfg = dict(
        n_conv_layers=3,
        in_channels=1,
        hidden_channels=[4, 8, 8],
        out_channels=1,
        ks=3,
        padding=1,
        padding_mode="circular",
        n_block_layers=1,
    )
    B, L = 2, 16
    K, pad = cfg["ks"], cfg["padding"]
    assert cfg["in_channels"] == 1            # forward() unsqueezes a (B, L) input
    assert 2 * pad == K - 1                   # length-preserving convs (skips need it)
    assert pad < L                            # circular wrap assumes padding <= L

    sched, layer_shapes = build_model_spec(
        n_conv_layers=cfg["n_conv_layers"], in_channels=cfg["in_channels"],
        hidden_channels=cfg["hidden_channels"], out_channels=cfg["out_channels"],
        n_block_layers=cfg["n_block_layers"], padding_mode=cfg["padding_mode"])

    maxc = max([cfg["in_channels"], cfg["out_channels"]]
               + list(cfg["hidden_channels"]))
    Cmax = ((maxc + 7) // 8) * 8              # sublane-aligned channel padding

    key = jax.random.PRNGKey(0)
    layers = []
    for (cin, cout) in layer_shapes:
        key, sub = jax.random.split(key)
        layers.append(_init_conv(sub, cin, cout, K))
    key, kx = jax.random.split(key)
    x = jax.random.normal(kx, (B, L), jnp.float32)

    w_all = pack_weights(layers, Cmax, K)     # (n_layers, Cmax, Cmax*K + 1)

    fwd = make_forward(sched=sched, Cmax=Cmax, K=K, padding=pad, L=L, B=B,
                       out_channels=cfg["out_channels"], n_layers=len(layers))

    out = jax.block_until_ready(fwd(x, w_all))
    ref = jax.block_until_ready(forward_ref(x, sched, layers, pad))

    assert out.shape == (B, L), out.shape
    np.testing.assert_allclose(np.asarray(out), np.asarray(ref),
                               rtol=1e-5, atol=1e-5)
    print("KERNEL_OK")
</pallas_src>

<mosaic_0001>
module attributes {stable_mosaic.version = 11 : i64} {
  func.func @_fused_kernel(%arg0: i32, %arg1: memref<1x1x16xf32, #tpu.memory_space<vmem>>, %arg2: memref<12x8x25xf32, #tpu.memory_space<vmem>>, %arg3: memref<1x1x16xf32, #tpu.memory_space<vmem>>) attributes {dimension_semantics = [#tpu.dimension_semantics<parallel>], iteration_bounds = array<i64: 2>, scalar_prefetch = 0 : i64, scratch_operands = 0 : i64, tpu.core_type = #tpu.core_type<tc>, window_params = [{transform_indices = @transform_0, window_bounds = array<i64: 1, 1, 16>}, {pipeline_mode = #tpu.pipeline_mode<synchronous>, transform_indices = @transform_1, window_bounds = array<i64: 12, 8, 25>}, {transform_indices = @transform_2, window_bounds = array<i64: 1, 1, 16>}]} {
    %cst = arith.constant 1.000000e+00 : f32
    %0 = vector.broadcast %cst : f32 to vector<1x16xf32>
    %c0 = arith.constant 0 : index
    %c0_0 = arith.constant 0 : index
    %c0_1 = arith.constant 0 : index
    %1 = vector.load %arg1[%c0, %c0_0, %c0_1] : memref<1x1x16xf32, #tpu.memory_space<vmem>>, vector<1x1x16xf32>
    %2 = vector.shape_cast %1 : vector<1x1x16xf32> to vector<1x16xf32>
    %3 = vector.shape_cast %2 : vector<1x16xf32> to vector<1x16xf32>
    %4 = vector.broadcast %3 : vector<1x16xf32> to vector<8x16xf32>
    %5 = vector.extract_strided_slice %4 {offsets = [0, 15], sizes = [8, 1], strides = [1, 1]} : vector<8x16xf32> to vector<8x1xf32>
    %6 = vector.extract_strided_slice %4 {offsets = [0, 0], sizes = [8, 1], strides = [1, 1]} : vector<8x16xf32> to vector<8x1xf32>
    %7 = tpu.concatenate %5, %4, %6 in 1 : vector<8x1xf32>, vector<8x16xf32>, vector<8x1xf32> -> vector<8x18xf32>
    %8 = vector.extract_strided_slice %7 {offsets = [0, 0], sizes = [8, 16], strides = [1, 1]} : vector<8x18xf32> to vector<8x16xf32>
    %9 = vector.extract_strided_slice %7 {offsets = [0, 1], sizes = [8, 16], strides = [1, 1]} : vector<8x18xf32> to vector<8x16xf32>
    %10 = vector.extract_strided_slice %7 {offsets = [0, 2], sizes = [8, 16], strides = [1, 1]} : vector<8x18xf32> to vector<8x16xf32>
    %11 = tpu.concatenate %8, %9, %10, %0 in 0 : vector<8x16xf32>, vector<8x16xf32>, vector<8x16xf32>, vector<1x16xf32> -> vector<25x16xf32>
    %c0_2 = arith.constant 0 : index
    %c0_3 = arith.constant 0 : index
    %c0_4 = arith.constant 0 : index
    %12 = vector.load %arg2[%c0_2, %c0_3, %c0_4] : memref<12x8x25xf32, #tpu.memory_space<vmem>>, vector<1x8x25xf32>
    %13 = vector.shape_cast %12 : vector<1x8x25xf32> to vector<8x25xf32>
    %cst_5 = arith.constant dense<0.000000e+00> : vector<8x16xf32>
    %14 = tpu.matmul %13, %11, %cst_5 {dimension_numbers = #tpu.dot_dimension_numbers<[1], [0], [0], [1], [0, 0, 1, 1], [], []>} : vector<8x25xf32>, vector<25x16xf32>, vector<8x16xf32> -> vector<8x16xf32>
    %cst_6 = arith.constant 0.000000e+00 : f32
    %15 = vector.broadcast %cst_6 : f32 to vector<8x16xf32>
    %16 = arith.maximumf %14, %15 : vector<8x16xf32>
    %17 = vector.extract_strided_slice %16 {offsets = [0, 15], sizes = [8, 1], strides = [1, 1]} : vector<8x16xf32> to vector<8x1xf32>
    %18 = vector.extract_strided_slice %16 {offsets = [0, 0], sizes = [8, 1], strides = [1, 1]} : vector<8x16xf32> to vector<8x1xf32>
    %19 = tpu.concatenate %17, %16, %18 in 1 : vector<8x1xf32>, vector<8x16xf32>, vector<8x1xf32> -> vector<8x18xf32>
    %20 = vector.extract_strided_slice %19 {offsets = [0, 0], sizes = [8, 16], strides = [1, 1]} : vector<8x18xf32> to vector<8x16xf32>
    %21 = vector.extract_strided_slice %19 {offsets = [0, 1], sizes = [8, 16], strides = [1, 1]} : vector<8x18xf32> to vector<8x16xf32>
    %22 = vector.extract_strided_slice %19 {offsets = [0, 2], sizes = [8, 16], strides = [1, 1]} : vector<8x18xf32> to vector<8x16xf32>
    %23 = tpu.concatenate %20, %21, %22, %0 in 0 : vector<8x16xf32>, vector<8x16xf32>, vector<8x16xf32>, vector<1x16xf32> -> vector<25x16xf32>
    %c1 = arith.constant 1 : index
    %c0_7 = arith.constant 0 : index
    %c0_8 = arith.constant 0 : index
    %24 = vector.load %arg2[%c1, %c0_7, %c0_8] : memref<12x8x25xf32, #tpu.memory_space<vmem>>, vector<1x8x25xf32>
    %25 = vector.shape_cast %24 : vector<1x8x25xf32> to vector<8x25xf32>
    %cst_9 = arith.constant dense<0.000000e+00> : vector<8x16xf32>
    %26 = tpu.matmul %25, %23, %cst_9 {dimension_numbers = #tpu.dot_dimension_numbers<[1], [0], [0], [1], [0, 0, 1, 1], [], []>} : vector<8x25xf32>, vector<25x16xf32>, vector<8x16xf32> -> vector<8x16xf32>
    %cst_10 = arith.constant 0.000000e+00 : f32
    %27 = vector.broadcast %cst_10 : f32 to vector<8x16xf32>
    %28 = arith.maximumf %26, %27 : vector<8x16xf32>
    %29 = vector.extract_strided_slice %28 {offsets = [0, 15], sizes = [8, 1], strides = [1, 1]} : vector<8x16xf32> to vector<8x1xf32>
    %30 = vector.extract_strided_slice %28 {offsets = [0, 0], sizes = [8, 1], strides = [1, 1]} : vector<8x16xf32> to vector<8x1xf32>
    %31 = tpu.concatenate %29, %28, %30 in 1 : vector<8x1xf32>, vector<8x16xf32>, vector<8x1xf32> -> vector<8x18xf32>
    %32 = vector.extract_strided_slice %31 {offsets = [0, 0], sizes = [8, 16], strides = [1, 1]} : vector<8x18xf32> to vector<8x16xf32>
    %33 = vector.extract_strided_slice %31 {offsets = [0, 1], sizes = [8, 16], strides = [1, 1]} : vector<8x18xf32> to vector<8x16xf32>
    %34 = vector.extract_strided_slice %31 {offsets = [0, 2], sizes = [8, 16], strides = [1, 1]} : vector<8x18xf32> to vector<8x16xf32>
    %35 = tpu.concatenate %32, %33, %34, %0 in 0 : vector<8x16xf32>, vector<8x16xf32>, vector<8x16xf32>, vector<1x16xf32> -> vector<25x16xf32>
    %c2 = arith.constant 2 : index
    %c0_11 = arith.constant 0 : index
    %c0_12 = arith.constant 0 : index
    %36 = vector.load %arg2[%c2, %c0_11, %c0_12] : memref<12x8x25xf32, #tpu.memory_space<vmem>>, vector<1x8x25xf32>
    %37 = vector.shape_cast %36 : vector<1x8x25xf32> to vector<8x25xf32>
    %cst_13 = arith.constant dense<0.000000e+00> : vector<8x16xf32>
    %38 = tpu.matmul %37, %35, %cst_13 {dimension_numbers = #tpu.dot_dimension_numbers<[1], [0], [0], [1], [0, 0, 1, 1], [], []>} : vector<8x25xf32>, vector<25x16xf32>, vector<8x16xf32> -> vector<8x16xf32>
    %cst_14 = arith.constant 0.000000e+00 : f32
    %39 = vector.broadcast %cst_14 : f32 to vector<8x16xf32>
    %40 = arith.maximumf %38, %39 : vector<8x16xf32>
    %41 = vector.extract_strided_slice %40 {offsets = [0, 15], sizes = [8, 1], strides = [1, 1]} : vector<8x16xf32> to vector<8x1xf32>
    %42 = vector.extract_strided_slice %40 {offsets = [0, 0], sizes = [8, 1], strides = [1, 1]} : vector<8x16xf32> to vector<8x1xf32>
    %43 = tpu.concatenate %41, %40, %42 in 1 : vector<8x1xf32>, vector<8x16xf32>, vector<8x1xf32> -> vector<8x18xf32>
    %44 = vector.extract_strided_slice %43 {offsets = [0, 0], sizes = [8, 16], strides = [1, 1]} : vector<8x18xf32> to vector<8x16xf32>
    %45 = vector.extract_strided_slice %43 {offsets = [0, 1], sizes = [8, 16], strides = [1, 1]} : vector<8x18xf32> to vector<8x16xf32>
    %46 = vector.extract_strided_slice %43 {offsets = [0, 2], sizes = [8, 16], strides = [1, 1]} : vector<8x18xf32> to vector<8x16xf32>
    %47 = tpu.concatenate %44, %45, %46, %0 in 0 : vector<8x16xf32>, vector<8x16xf32>, vector<8x16xf32>, vector<1x16xf32> -> vector<25x16xf32>
    %c3 = arith.constant 3 : index
    %c0_15 = arith.constant 0 : index
    %c0_16 = arith.constant 0 : index
    %48 = vector.load %arg2[%c3, %c0_15, %c0_16] : memref<12x8x25xf32, #tpu.memory_space<vmem>>, vector<1x8x25xf32>
    %49 = vector.shape_cast %48 : vector<1x8x25xf32> to vector<8x25xf32>
    %cst_17 = arith.constant dense<0.000000e+00> : vector<8x16xf32>
    %50 = tpu.matmul %49, %47, %cst_17 {dimension_numbers = #tpu.dot_dimension_numbers<[1], [0], [0], [1], [0, 0, 1, 1], [], []>} : vector<8x25xf32>, vector<25x16xf32>, vector<8x16xf32> -> vector<8x16xf32>
    %cst_18 = arith.constant 0.000000e+00 : f32
    %51 = vector.broadcast %cst_18 : f32 to vector<8x16xf32>
    %52 = arith.maximumf %50, %51 : vector<8x16xf32>
    %53 = vector.extract_strided_slice %52 {offsets = [0, 15], sizes = [8, 1], strides = [1, 1]} : vector<8x16xf32> to vector<8x1xf32>
    %54 = vector.extract_strided_slice %52 {offsets = [0, 0], sizes = [8, 1], strides = [1, 1]} : vector<8x16xf32> to vector<8x1xf32>
    %55 = tpu.concatenate %53, %52, %54 in 1 : vector<8x1xf32>, vector<8x16xf32>, vector<8x1xf32> -> vector<8x18xf32>
    %56 = vector.extract_strided_slice %55 {offsets = [0, 0], sizes = [8, 16], strides = [1, 1]} : vector<8x18xf32> to vector<8x16xf32>
    %57 = vector.extract_strided_slice %55 {offsets = [0, 1], sizes = [8, 16], strides = [1, 1]} : vector<8x18xf32> to vector<8x16xf32>
    %58 = vector.extract_strided_slice %55 {offsets = [0, 2], sizes = [8, 16], strides = [1, 1]} : vector<8x18xf32> to vector<8x16xf32>
    %59 = tpu.concatenate %56, %57, %58, %0 in 0 : vector<8x16xf32>, vector<8x16xf32>, vector<8x16xf32>, vector<1x16xf32> -> vector<25x16xf32>
    %c4 = arith.constant 4 : index
    %c0_19 = arith.constant 0 : index
    %c0_20 = arith.constant 0 : index
    %60 = vector.load %arg2[%c4, %c0_19, %c0_20] : memref<12x8x25xf32, #tpu.memory_space<vmem>>, vector<1x8x25xf32>
    %61 = vector.shape_cast %60 : vector<1x8x25xf32> to vector<8x25xf32>
    %cst_21 = arith.constant dense<0.000000e+00> : vector<8x16xf32>
    %62 = tpu.matmul %61, %59, %cst_21 {dimension_numbers = #tpu.dot_dimension_numbers<[1], [0], [0], [1], [0, 0, 1, 1], [], []>} : vector<8x25xf32>, vector<25x16xf32>, vector<8x16xf32> -> vector<8x16xf32>
    %cst_22 = arith.constant 0.000000e+00 : f32
    %63 = vector.broadcast %cst_22 : f32 to vector<8x16xf32>
    %64 = arith.maximumf %62, %63 : vector<8x16xf32>
    %65 = vector.extract_strided_slice %64 {offsets = [0, 15], sizes = [8, 1], strides = [1, 1]} : vector<8x16xf32> to vector<8x1xf32>
    %66 = vector.extract_strided_slice %64 {offsets = [0, 0], sizes = [8, 1], strides = [1, 1]} : vector<8x16xf32> to vector<8x1xf32>
    %67 = tpu.concatenate %65, %64, %66 in 1 : vector<8x1xf32>, vector<8x16xf32>, vector<8x1xf32> -> vector<8x18xf32>
    %68 = vector.extract_strided_slice %67 {offsets = [0, 0], sizes = [8, 16], strides = [1, 1]} : vector<8x18xf32> to vector<8x16xf32>
    %69 = vector.extract_strided_slice %67 {offsets = [0, 1], sizes = [8, 16], strides = [1, 1]} : vector<8x18xf32> to vector<8x16xf32>
    %70 = vector.extract_strided_slice %67 {offsets = [0, 2], sizes = [8, 16], strides = [1, 1]} : vector<8x18xf32> to vector<8x16xf32>
    %71 = tpu.concatenate %68, %69, %70, %0 in 0 : vector<8x16xf32>, vector<8x16xf32>, vector<8x16xf32>, vector<1x16xf32> -> vector<25x16xf32>
    %c5 = arith.constant 5 : index
    %c0_23 = arith.constant 0 : index
    %c0_24 = arith.constant 0 : index
    %72 = vector.load %arg2[%c5, %c0_23, %c0_24] : memref<12x8x25xf32, #tpu.memory_space<vmem>>, vector<1x8x25xf32>
    %73 = vector.shape_cast %72 : vector<1x8x25xf32> to vector<8x25xf32>
    %cst_25 = arith.constant dense<0.000000e+00> : vector<8x16xf32>
    %74 = tpu.matmul %73, %71, %cst_25 {dimension_numbers = #tpu.dot_dimension_numbers<[1], [0], [0], [1], [0, 0, 1, 1], [], []>} : vector<8x25xf32>, vector<25x16xf32>, vector<8x16xf32> -> vector<8x16xf32>
    %cst_26 = arith.constant 0.000000e+00 : f32
    %75 = vector.broadcast %cst_26 : f32 to vector<8x16xf32>
    %76 = arith.maximumf %74, %75 : vector<8x16xf32>
    %77 = vector.extract_strided_slice %76 {offsets = [0, 15], sizes = [8, 1], strides = [1, 1]} : vector<8x16xf32> to vector<8x1xf32>
    %78 = vector.extract_strided_slice %76 {offsets = [0, 0], sizes = [8, 1], strides = [1, 1]} : vector<8x16xf32> to vector<8x1xf32>
    %79 = tpu.concatenate %77, %76, %78 in 1 : vector<8x1xf32>, vector<8x16xf32>, vector<8x1xf32> -> vector<8x18xf32>
    %80 = vector.extract_strided_slice %79 {offsets = [0, 0], sizes = [8, 16], strides = [1, 1]} : vector<8x18xf32> to vector<8x16xf32>
    %81 = vector.extract_strided_slice %79 {offsets = [0, 1], sizes = [8, 16], strides = [1, 1]} : vector<8x18xf32> to vector<8x16xf32>
    %82 = vector.extract_strided_slice %79 {offsets = [0, 2], sizes = [8, 16], strides = [1, 1]} : vector<8x18xf32> to vector<8x16xf32>
    %83 = tpu.concatenate %80, %81, %82, %0 in 0 : vector<8x16xf32>, vector<8x16xf32>, vector<8x16xf32>, vector<1x16xf32> -> vector<25x16xf32>
    %c6 = arith.constant 6 : index
    %c0_27 = arith.constant 0 : index
    %c0_28 = arith.constant 0 : index
    %84 = vector.load %arg2[%c6, %c0_27, %c0_28] : memref<12x8x25xf32, #tpu.memory_space<vmem>>, vector<1x8x25xf32>
    %85 = vector.shape_cast %84 : vector<1x8x25xf32> to vector<8x25xf32>
    %cst_29 = arith.constant dense<0.000000e+00> : vector<8x16xf32>
    %86 = tpu.matmul %85, %83, %cst_29 {dimension_numbers = #tpu.dot_dimension_numbers<[1], [0], [0], [1], [0, 0, 1, 1], [], []>} : vector<8x25xf32>, vector<25x16xf32>, vector<8x16xf32> -> vector<8x16xf32>
    %cst_30 = arith.constant 0.000000e+00 : f32
    %87 = vector.broadcast %cst_30 : f32 to vector<8x16xf32>
    %88 = arith.maximumf %86, %87 : vector<8x16xf32>
    %89 = vector.extract_strided_slice %88 {offsets = [0, 15], sizes = [8, 1], strides = [1, 1]} : vector<8x16xf32> to vector<8x1xf32>
    %90 = vector.extract_strided_slice %88 {offsets = [0, 0], sizes = [8, 1], strides = [1, 1]} : vector<8x16xf32> to vector<8x1xf32>
    %91 = tpu.concatenate %89, %88, %90 in 1 : vector<8x1xf32>, vector<8x16xf32>, vector<8x1xf32> -> vector<8x18xf32>
    %92 = vector.extract_strided_slice %91 {offsets = [0, 0], sizes = [8, 16], strides = [1, 1]} : vector<8x18xf32> to vector<8x16xf32>
    %93 = vector.extract_strided_slice %91 {offsets = [0, 1], sizes = [8, 16], strides = [1, 1]} : vector<8x18xf32> to vector<8x16xf32>
    %94 = vector.extract_strided_slice %91 {offsets = [0, 2], sizes = [8, 16], strides = [1, 1]} : vector<8x18xf32> to vector<8x16xf32>
    %95 = tpu.concatenate %92, %93, %94, %0 in 0 : vector<8x16xf32>, vector<8x16xf32>, vector<8x16xf32>, vector<1x16xf32> -> vector<25x16xf32>
    %c7 = arith.constant 7 : index
    %c0_31 = arith.constant 0 : index
    %c0_32 = arith.constant 0 : index
    %96 = vector.load %arg2[%c7, %c0_31, %c0_32] : memref<12x8x25xf32, #tpu.memory_space<vmem>>, vector<1x8x25xf32>
    %97 = vector.shape_cast %96 : vector<1x8x25xf32> to vector<8x25xf32>
    %cst_33 = arith.constant dense<0.000000e+00> : vector<8x16xf32>
    %98 = tpu.matmul %97, %95, %cst_33 {dimension_numbers = #tpu.dot_dimension_numbers<[1], [0], [0], [1], [0, 0, 1, 1], [], []>} : vector<8x25xf32>, vector<25x16xf32>, vector<8x16xf32> -> vector<8x16xf32>
    %cst_34 = arith.constant 0.000000e+00 : f32
    %99 = vector.broadcast %cst_34 : f32 to vector<8x16xf32>
    %100 = arith.maximumf %98, %99 : vector<8x16xf32>
    %101 = arith.addf %100, %52 : vector<8x16xf32>
    %102 = vector.extract_strided_slice %101 {offsets = [0, 15], sizes = [8, 1], strides = [1, 1]} : vector<8x16xf32> to vector<8x1xf32>
    %103 = vector.extract_strided_slice %101 {offsets = [0, 0], sizes = [8, 1], strides = [1, 1]} : vector<8x16xf32> to vector<8x1xf32>
    %104 = tpu.concatenate %102, %101, %103 in 1 : vector<8x1xf32>, vector<8x16xf32>, vector<8x1xf32> -> vector<8x18xf32>
    %105 = vector.extract_strided_slice %104 {offsets = [0, 0], sizes = [8, 16], strides = [1, 1]} : vector<8x18xf32> to vector<8x16xf32>
    %106 = vector.extract_strided_slice %104 {offsets = [0, 1], sizes = [8, 16], strides = [1, 1]} : vector<8x18xf32> to vector<8x16xf32>
    %107 = vector.extract_strided_slice %104 {offsets = [0, 2], sizes = [8, 16], strides = [1, 1]} : vector<8x18xf32> to vector<8x16xf32>
    %108 = tpu.concatenate %105, %106, %107, %0 in 0 : vector<8x16xf32>, vector<8x16xf32>, vector<8x16xf32>, vector<1x16xf32> -> vector<25x16xf32>
    %c8 = arith.constant 8 : index
    %c0_35 = arith.constant 0 : index
    %c0_36 = arith.constant 0 : index
    %109 = vector.load %arg2[%c8, %c0_35, %c0_36] : memref<12x8x25xf32, #tpu.memory_space<vmem>>, vector<1x8x25xf32>
    %110 = vector.shape_cast %109 : vector<1x8x25xf32> to vector<8x25xf32>
    %cst_37 = arith.constant dense<0.000000e+00> : vector<8x16xf32>
    %111 = tpu.matmul %110, %108, %cst_37 {dimension_numbers = #tpu.dot_dimension_numbers<[1], [0], [0], [1], [0, 0, 1, 1], [], []>} : vector<8x25xf32>, vector<25x16xf32>, vector<8x16xf32> -> vector<8x16xf32>
    %cst_38 = arith.constant 0.000000e+00 : f32
    %112 = vector.broadcast %cst_38 : f32 to vector<8x16xf32>
    %113 = arith.maximumf %111, %112 : vector<8x16xf32>
    %114 = vector.extract_strided_slice %113 {offsets = [0, 15], sizes = [8, 1], strides = [1, 1]} : vector<8x16xf32> to vector<8x1xf32>
    %115 = vector.extract_strided_slice %113 {offsets = [0, 0], sizes = [8, 1], strides = [1, 1]} : vector<8x16xf32> to vector<8x1xf32>
    %116 = tpu.concatenate %114, %113, %115 in 1 : vector<8x1xf32>, vector<8x16xf32>, vector<8x1xf32> -> vector<8x18xf32>
    %117 = vector.extract_strided_slice %116 {offsets = [0, 0], sizes = [8, 16], strides = [1, 1]} : vector<8x18xf32> to vector<8x16xf32>
    %118 = vector.extract_strided_slice %116 {offsets = [0, 1], sizes = [8, 16], strides = [1, 1]} : vector<8x18xf32> to vector<8x16xf32>
    %119 = vector.extract_strided_slice %116 {offsets = [0, 2], sizes = [8, 16], strides = [1, 1]} : vector<8x18xf32> to vector<8x16xf32>
    %120 = tpu.concatenate %117, %118, %119, %0 in 0 : vector<8x16xf32>, vector<8x16xf32>, vector<8x16xf32>, vector<1x16xf32> -> vector<25x16xf32>
    %c9 = arith.constant 9 : index
    %c0_39 = arith.constant 0 : index
    %c0_40 = arith.constant 0 : index
    %121 = vector.load %arg2[%c9, %c0_39, %c0_40] : memref<12x8x25xf32, #tpu.memory_space<vmem>>, vector<1x8x25xf32>
    %122 = vector.shape_cast %121 : vector<1x8x25xf32> to vector<8x25xf32>
    %cst_41 = arith.constant dense<0.000000e+00> : vector<8x16xf32>
    %123 = tpu.matmul %122, %120, %cst_41 {dimension_numbers = #tpu.dot_dimension_numbers<[1], [0], [0], [1], [0, 0, 1, 1], [], []>} : vector<8x25xf32>, vector<25x16xf32>, vector<8x16xf32> -> vector<8x16xf32>
    %cst_42 = arith.constant 0.000000e+00 : f32
    %124 = vector.broadcast %cst_42 : f32 to vector<8x16xf32>
    %125 = arith.maximumf %123, %124 : vector<8x16xf32>
    %126 = arith.addf %125, %28 : vector<8x16xf32>
    %127 = vector.extract_strided_slice %126 {offsets = [0, 15], sizes = [8, 1], strides = [1, 1]} : vector<8x16xf32> to vector<8x1xf32>
    %128 = vector.extract_strided_slice %126 {offsets = [0, 0], sizes = [8, 1], strides = [1, 1]} : vector<8x16xf32> to vector<8x1xf32>
    %129 = tpu.concatenate %127, %126, %128 in 1 : vector<8x1xf32>, vector<8x16xf32>, vector<8x1xf32> -> vector<8x18xf32>
    %130 = vector.extract_strided_slice %129 {offsets = [0, 0], sizes = [8, 16], strides = [1, 1]} : vector<8x18xf32> to vector<8x16xf32>
    %131 = vector.extract_strided_slice %129 {offsets = [0, 1], sizes = [8, 16], strides = [1, 1]} : vector<8x18xf32> to vector<8x16xf32>
    %132 = vector.extract_strided_slice %129 {offsets = [0, 2], sizes = [8, 16], strides = [1, 1]} : vector<8x18xf32> to vector<8x16xf32>
    %133 = tpu.concatenate %130, %131, %132, %0 in 0 : vector<8x16xf32>, vector<8x16xf32>, vector<8x16xf32>, vector<1x16xf32> -> vector<25x16xf32>
    %c10 = arith.constant 10 : index
    %c0_43 = arith.constant 0 : index
    %c0_44 = arith.constant 0 : index
    %134 = vector.load %arg2[%c10, %c0_43, %c0_44] : memref<12x8x25xf32, #tpu.memory_space<vmem>>, vector<1x8x25xf32>
    %135 = vector.shape_cast %134 : vector<1x8x25xf32> to vector<8x25xf32>
    %cst_45 = arith.constant dense<0.000000e+00> : vector<8x16xf32>
    %136 = tpu.matmul %135, %133, %cst_45 {dimension_numbers = #tpu.dot_dimension_numbers<[1], [0], [0], [1], [0, 0, 1, 1], [], []>} : vector<8x25xf32>, vector<25x16xf32>, vector<8x16xf32> -> vector<8x16xf32>
    %cst_46 = arith.constant 0.000000e+00 : f32
    %137 = vector.broadcast %cst_46 : f32 to vector<8x16xf32>
    %138 = arith.maximumf %136, %137 : vector<8x16xf32>
    %cst_47 = arith.constant 0.000000e+00 : f32
    %139 = vector.broadcast %cst_47 : f32 to vector<8x1xf32>
    %140 = tpu.concatenate %139, %138, %139 in 1 : vector<8x1xf32>, vector<8x16xf32>, vector<8x1xf32> -> vector<8x18xf32>
    %141 = vector.extract_strided_slice %140 {offsets = [0, 0], sizes = [8, 16], strides = [1, 1]} : vector<8x18xf32> to vector<8x16xf32>
    %142 = vector.extract_strided_slice %140 {offsets = [0, 1], sizes = [8, 16], strides = [1, 1]} : vector<8x18xf32> to vector<8x16xf32>
    %143 = vector.extract_strided_slice %140 {offsets = [0, 2], sizes = [8, 16], strides = [1, 1]} : vector<8x18xf32> to vector<8x16xf32>
    %144 = tpu.concatenate %141, %142, %143, %0 in 0 : vector<8x16xf32>, vector<8x16xf32>, vector<8x16xf32>, vector<1x16xf32> -> vector<25x16xf32>
    %c11 = arith.constant 11 : index
    %c0_48 = arith.constant 0 : index
    %c0_49 = arith.constant 0 : index
    %145 = vector.load %arg2[%c11, %c0_48, %c0_49] : memref<12x8x25xf32, #tpu.memory_space<vmem>>, vector<1x8x25xf32>
    %146 = vector.shape_cast %145 : vector<1x8x25xf32> to vector<8x25xf32>
    %cst_50 = arith.constant dense<0.000000e+00> : vector<8x16xf32>
    %147 = tpu.matmul %146, %144, %cst_50 {dimension_numbers = #tpu.dot_dimension_numbers<[1], [0], [0], [1], [0, 0, 1, 1], [], []>} : vector<8x25xf32>, vector<25x16xf32>, vector<8x16xf32> -> vector<8x16xf32>
    %148 = vector.extract_strided_slice %147 {offsets = [0, 0], sizes = [1, 16], strides = [1, 1]} : vector<8x16xf32> to vector<1x16xf32>
    %c0_51 = arith.constant 0 : index
    %c0_52 = arith.constant 0 : index
    %c0_53 = arith.constant 0 : index
    %149 = vector.load %arg3[%c0_51, %c0_52, %c0_53] : memref<1x1x16xf32, #tpu.memory_space<vmem>>, vector<1x1x16xf32>
    %150 = vector.shape_cast %149 : vector<1x1x16xf32> to vector<1x16xf32>
    %151 = vector.shape_cast %148 : vector<1x16xf32> to vector<1x1x16xf32>
    tpu.vector_store %arg3[%c0_51, %c0_52, %c0_53], %151 {strides = array<i32>} : memref<1x1x16xf32, #tpu.memory_space<vmem>>, vector<1x1x16xf32>,
    return
  }
  func.func @transform_0(%arg0: i32) -> (i32, i32, i32) {
    %c0_i32 = arith.constant 0 : i32
    %c0_i32_0 = arith.constant 0 : i32
    %c0_i32_1 = arith.constant 0 : i32
    return %arg0, %c0_i32, %c0_i32_0 : i32, i32, i32
  }
  func.func @transform_1(%arg0: i32) -> (i32, i32, i32) {
    %c0_i32 = arith.constant 0 : i32
    %c0_i32_0 = arith.constant 0 : i32
    %c0_i32_1 = arith.constant 0 : i32
    %c0_i32_2 = arith.constant 0 : i32
    return %c0_i32, %c0_i32_0, %c0_i32_1 : i32, i32, i32
  }
  func.func @transform_2(%arg0: i32) -> (i32, i32, i32) {
    %c0_i32 = arith.constant 0 : i32
    %c0_i32_0 = arith.constant 0 : i32
    %c0_i32_1 = arith.constant 0 : i32
    return %arg0, %c0_i32, %c0_i32_0 : i32, i32, i32
  }
}

</mosaic_0001>

<llo_original>
// kernel: fwd.1
$region0: #{fwd.1}
  #allocation0 [shape = 'u32[]', space=smem, size = 0x4, offset = 0x4, fixed_abs, tag = 'smem constant byte address 0x4 - core index']
  #allocation1 [shape = 'u32[72,128]{1,0:T(1,128)}', space=vmem, size = 0x9000, scoped, tag = 'internal scratch']
  %s0 = inlined_call_operand.hbm [shape: f32[2,1,16], index: 0, kind: input, shape index: {}]
  %s1 = inlined_call_operand.hbm [shape: f32[12,8,25], index: 1, kind: input, shape index: {}]
  %s2 = inlined_call_operand.hbm [shape: f32[2,1,16], index: 2, kind: output, shape index: {}]
  %s3 = sld [smem:[#allocation0]]
  $region49: #{fwd.1} parent=0
    _
  %s5 = ssub.s32 1, %s3
  %s6 = scalar_select 0, %s5, %s3
  $region1: #{fwd.1} parent=0
    #allocation2 [shape = 'u8[1024]{0}', space=vmem, size = 0x400, scoped, tag = 'input window, operand 0']
    #allocation3 [shape = 's32[2]{0}', space=sflag, size = 0x8, scoped, tag = 'scoped memory for fwd.1']
    #allocation4 [shape = 's32[2]{0}', space=sflag, size = 0x8, scoped, tag = 'scoped memory for fwd.1']
    #allocation5 [shape = 'u8[49152]{0}', space=vmem, size = 0xc000, scoped, tag = 'input window, operand 1, single buffered']
    #allocation6 [shape = 's32[1]{0}', space=sflag, size = 0x4, scoped, tag = 'scoped memory for fwd.1']
    #allocation7 [shape = 'u8[1024]{0}', space=vmem, size = 0x400, scoped, tag = 'output window, operand 0']
    %7 = vsyncpa [#allocation3], 0
    %s8 = scalar_lea.sflag [#allocation3], 1
    %9 = vsyncpa %s8, 0
    %10 = vsyncpa [#allocation6], 0
    %11 = vsyncpa [#allocation4], 0
    %s12 = scalar_lea.sflag [#allocation4], 1
    %13 = vsyncpa %s12, 0
    loop: start=0, step=1, limit=4
    $region2: #{fwd.1} parent=1 // loop_pre_header
      _
    $region3: #{fwd.1} parent=1 // loop_header
      %s15 = sphi 0, %s19
      %p16 = scmp.ge.s32.totalorder %s15, 4
      %s25 = sphi 0, %s27
      %s28 = sphi 0, %s25
      %s29 = sphi 0, %s28
      %s45 = sphi 0, %s29
      %s49 = sphi 0, %s49
      %s51 = sphi 0, %s49
      %s52 = sphi 0, %s51
      %s66 = sphi 0, %s52
      %s72 = sphi 0, %s74
      %s75 = sphi 0, %s72
      %s76 = sphi 0, %s75
      %s92 = sphi 0, %s76
    $region4: #{fwd.1} parent=1 // loop_header_branch
      %18 = sbr.rel (%p16) target = $region8
    $region5: #{fwd.1} parent=1 // loop_body
      %s20 = ssub.s32 %s15, 1
      %s21 = ssub.s32 %s15, 2
      %s22 = sadd.s32 %s15, 1
      %s23 = ssub.s32 %s15, %s22
      %p24 = scmp.eq.s32.totalorder %s23, 0
      %s26 = sadd.s32 %s25, 1
      %s27 = scalar_select %p24, %s25, %s26
      %p30 = pneg %p24
      %p31 = scmp.eq.s32.totalorder %s15, 1
      %p32 = por %p30, %p31
      %p33 = scmp.ne.s32.totalorder %s25, %s28
      %p34 = scmp.eq.s32.totalorder %s15, 0
      %p35 = por %p33, %p34
      %p36 = scmp.ne.s32.totalorder %s25, %s28
      %p37 = scmp.eq.s32.totalorder %s20, 1
      %p38 = por %p36, %p37
      %p39 = scmp.ne.s32.totalorder %s28, %s29
      %p40 = scmp.eq.s32.totalorder %s20, 0
      %p41 = por %p39, %p40
      %p42 = scmp.ne.s32.totalorder %s28, %s29
      %p43 = scmp.eq.s32.totalorder %s21, 1
      %p44 = por %p42, %p43
      %p46 = scmp.ne.s32.totalorder %s29, %s45
      %p47 = scmp.eq.s32.totalorder %s21, 0
      %p48 = por %p46, %p47
      %s50 = sadd.s32 %s49, 1
      %p53 = scmp.eq.s32.totalorder %s15, 1
      %p54 = scmp.ne.s32.totalorder %s49, %s51
      %p55 = scmp.eq.s32.totalorder %s15, 0
      %p56 = por %p54, %p55
      %p57 = scmp.ne.s32.totalorder %s49, %s51
      %p58 = scmp.eq.s32.totalorder %s20, 1
      %p59 = por %p57, %p58
      %p60 = scmp.ne.s32.totalorder %s51, %s52
      %p61 = scmp.eq.s32.totalorder %s20, 0
      %p62 = por %p60, %p61
      %p63 = scmp.ne.s32.totalorder %s51, %s52
      %p64 = scmp.eq.s32.totalorder %s21, 1
      %p65 = por %p63, %p64
      %p67 = scmp.ne.s32.totalorder %s52, %s66
      %p68 = scmp.eq.s32.totalorder %s21, 0
      %p69 = por %p67, %p68
      %s70 = ssub.s32 %s15, %s22
      %p71 = scmp.eq.s32.totalorder %s70, 0
      %s73 = sadd.s32 %s72, 1
      %s74 = scalar_select %p71, %s72, %s73
      %p77 = pneg %p71
      %p78 = scmp.eq.s32.totalorder %s15, 1
      %p79 = por %p77, %p78
      %p80 = scmp.ne.s32.totalorder %s72, %s75
      %p81 = scmp.eq.s32.totalorder %s15, 0
      %p82 = por %p80, %p81
      %p83 = scmp.ne.s32.totalorder %s72, %s75
      %p84 = scmp.eq.s32.totalorder %s20, 1
      %p85 = por %p83, %p84
      %p86 = scmp.ne.s32.totalorder %s75, %s76
      %p87 = scmp.eq.s32.totalorder %s20, 0
      %p88 = por %p86, %p87
      %p89 = scmp.ne.s32.totalorder %s75, %s76
      %p90 = scmp.eq.s32.totalorder %s21, 1
      %p91 = por %p89, %p90
      %p93 = scmp.ne.s32.totalorder %s76, %s92
      %p94 = scmp.eq.s32.totalorder %s21, 0
      %p95 = por %p93, %p94
      %p96 = scmp.le.s32.totalorder 1, %s15
      %p97 = scmp.lt.s32.totalorder %s15, 3
      %p98 = pnand %p96, %p97
      %p99 = pneg %p98
      // Predicated region
      $region9: #{fwd.1} parent=5 // pred_check
        _
      $region10: #{fwd.1} parent=5 // pred_check_branch
        %101 = sbr.rel (%p98) target = $region12
      $region11: #{fwd.1} parent=5 // pred_region
        %s102 = ssub.s32 %s15, 1
        // Predicated region
        $region13: #{fwd.1} parent=11 // pred_check
          %p103 = pneg %p62
        $region14: #{fwd.1} parent=11 // pred_check_branch
          %105 = sbr.rel (%p103) target = $region16
        $region15: #{fwd.1} parent=11 // pred_region
          %107 = vsyncadd [#allocation6], 0
          %s108 = sshll.u32 %s1, 4
          %s109 = int_to_ptr.hbm [resolvable:$true] %s108
          %s110 = sshll.u32 [#allocation5], 4
          %s111 = int_to_ptr.vmem [resolvable:$true] %s110
          %116 = dma.hbm_to_vmem [thread:$0]  %s109, 1536, %s111, [#allocation6], 128, 128, 8
        $region16: #{fwd.1} parent=11 // pred_fallthru
          _
      $region12: #{fwd.1} parent=5 // pred_fallthru
        _
      %p117 = scmp.lt.s32.totalorder %s15, 2
      // Predicated region
      $region17: #{fwd.1} parent=5 // pred_check
        %p118 = pneg %p117
      $region18: #{fwd.1} parent=5 // pred_check_branch
        %120 = sbr.rel (%p118) target = $region20
      $region19: #{fwd.1} parent=5 // pred_region
        // Predicated region
        $region21: #{fwd.1} parent=19 // pred_check
          %p121 = pneg %p35
        $region22: #{fwd.1} parent=19 // pred_check_branch
          %123 = sbr.rel (%p121) target = $region24
        $region23: #{fwd.1} parent=19 // pred_region
          %s124 = sand.u32 %s25, 1
          %s125 = scalar_lea.sflag [#allocation3], %s124
          %s126 = sand.u32 %s25, 1
          %s127 = scalar_lea.vmem [#allocation2], %s126
          %129 = vsyncadd %s125, 0
          %s130 = scalar_lea.hbm %s0, %s15
          %s132 = sshll.u32 %s130, 4
          %s133 = int_to_ptr.hbm [resolvable:$true] %s132
          %s134 = sshll.u32 %s127, 4
          %s135 = int_to_ptr.vmem [resolvable:$true] %s134
          %137 = dma.hbm_to_vmem [thread:$0]  %s133, 16, %s135, %s125
        $region24: #{fwd.1} parent=19 // pred_fallthru
          _
      $region20: #{fwd.1} parent=5 // pred_fallthru
        _
      %p138 = scmp.le.s32.totalorder 1, %s15
      %p139 = scmp.lt.s32.totalorder %s15, 3
      %p140 = pnand %p138, %p139
      %p141 = pneg %p140
      // Predicated region
      $region25: #{fwd.1} parent=5 // pred_check
        _
      $region26: #{fwd.1} parent=5 // pred_check_branch
        %143 = sbr.rel (%p140) target = $region28
      $region27: #{fwd.1} parent=5 // pred_region
        %s144 = ssub.s32 %s15, 1
        %s145 = sand.u32 %s28, 1
        %s146 = scalar_lea.sflag [#allocation3], %s145
        %s147 = sand.u32 %s28, 1
        %s148 = scalar_lea.vmem [#allocation2], %s147
        // Predicated region
        $region29: #{fwd.1} parent=27 // pred_check
          %p149 = pneg %p41
        $region30: #{fwd.1} parent=27 // pred_check_branch
          %151 = sbr.rel (%p149) target = $region32
        $region31: #{fwd.1} parent=27 // pred_region
          %153 = dma.done %s146, 16
        $region32: #{fwd.1} parent=27 // pred_fallthru
          _
        // Predicated region
        $region33: #{fwd.1} parent=27 // pred_check
          %p154 = pneg %p62
        $region34: #{fwd.1} parent=27 // pred_check_branch
          %156 = sbr.rel (%p154) target = $region36
        $region35: #{fwd.1} parent=27 // pred_region
          %158 = dma.done [#allocation6], 1536
        $region36: #{fwd.1} parent=27 // pred_fallthru
          _
        %s159 = sand.u32 %s28, 1
        %s160 = scalar_lea.sflag [#allocation3], %s159
        %s161 = sand.u32 %s28, 1
        %s162 = scalar_lea.vmem [#allocation2], %s161
        %p163 = pneg %p41
        %p164 = pneg %p38
        %p165 = pneg %p62
        %p166 = pneg %p59
        %p167 = pneg %p88
        %p168 = pneg %p85
        %s169 = sand.u32 %s75, 1
        %s170 = scalar_lea.sflag [#allocation4], %s169
        %s171 = sand.u32 %s75, 1
        %s172 = scalar_lea.vmem [#allocation7], %s171
        %v173 = vld [vmem:[%s148] sm:$0x1]
        %v175 = vperm.slane %v173, 0
        %176 = vrot.lane.b32.xlu0 %v175, 113
        %v177 = vpop.permute.xlu0 %176
        %179 = vrot.lane.b32.xlu0 %v175, 1
        %v180 = vpop.permute.xlu0 %179
        %182 = vrot.lane.b32.xlu0 %v175, 17
        %v183 = vpop.permute.xlu0 %182
        %vm185 = vcmask 7168
        %v186 = vsel %vm185, %v177, %v180
        %vm187 = vcmask 138240
        %v188 = vsel %vm187, %v186, %v183
        %190 = vrot.lane.b32.xlu0 %v188, 127
        %v191 = vpop.permute.xlu0 %190
        %193 = vrot.lane.b32.xlu0 %v188, 126
        %v194 = vpop.permute.xlu0 %193
        %v196 = vld [vmem:[#allocation5] sm:$0xff]
        %vm197 = vcmask 203776
        %v199 = vsel %vm197, %v196, 0
        %vm201 = vcmask 1040384
        %v203 = vsel %vm201, 1.0, 0
        %205 = vmatpush.msra.mxu0 0.0
        %206 = vmatpush.msra.mxu0 0.0
        %207 = vmatpush.msra.mxu0 0.0
        %208 = vmatpush.msra.mxu0 0.0
        %209 = vmatpush.msra.mxu0 0.0
        %210 = vmatpush.msra.mxu0 0.0
        %211 = vmatpush.msra.mxu0 0.0
        %212 = vmatpush.msra.mxu0 0.0
        %213 = vmatpush.msra.mxu0 0.0
        %214 = vmatpush.msra.mxu0 0.0
        %215 = vmatpush.msra.mxu0 0.0
        %216 = vmatpush.msra.mxu0 0.0
        %217 = vmatpush.msra.mxu0 %v203
        %218 = vmatpush.msra.mxu0 %v194
        %219 = vmatpush.msra.mxu0 %v191
        %220 = vmatpush.msra.mxu0 %v188
        %221 = vmatmul.f32.gmra.mxu0 %v199
        %v222 = vpop.f32.mrf.mxu0
        %v223 = vadd.f32 0.0, %v222
        %224 = vdwg.mxu0
        %v225 = vmax.f32 %v223, 0.0
        %227 = vrot.lane.b32.xlu0 %v225, 113
        %v228 = vpop.permute.xlu0 %227
        %230 = vrot.lane.b32.xlu0 %v225, 1
        %v231 = vpop.permute.xlu0 %230
        %233 = vrot.lane.b32.xlu0 %v225, 17
        %v234 = vpop.permute.xlu0 %233
        %v236 = vsel %vm185, %v228, %v231
        %v237 = vsel %vm187, %v236, %v234
        %239 = vrot.lane.b32.xlu0 %v237, 127
        %v240 = vpop.permute.xlu0 %239
        %242 = vrot.lane.b32.xlu0 %v237, 126
        %v243 = vpop.permute.xlu0 %242
        %s245 = scalar_lea.vmem [#allocation5], 8
        %v246 = vld [vmem:[%s245] sm:$0xff]
        %v248 = vsel %vm197, %v246, 0
        %250 = vmatpush.msra.mxu0 0.0
        %251 = vmatpush.msra.mxu0 0.0
        %252 = vmatpush.msra.mxu0 0.0
        %253 = vmatpush.msra.mxu0 0.0
        %254 = vmatpush.msra.mxu0 0.0
        %255 = vmatpush.msra.mxu0 0.0
        %256 = vmatpush.msra.mxu0 0.0
        %257 = vmatpush.msra.mxu0 0.0
        %258 = vmatpush.msra.mxu0 0.0
        %259 = vmatpush.msra.mxu0 0.0
        %260 = vmatpush.msra.mxu0 0.0
        %261 = vmatpush.msra.mxu0 0.0
        %262 = vmatpush.msra.mxu0 %v203
        %263 = vmatpush.msra.mxu0 %v243
        %264 = vmatpush.msra.mxu0 %v240
        %265 = vmatpush.msra.mxu0 %v237
        %266 = vmatmul.f32.gmra.mxu0 %v248
        %v267 = vpop.f32.mrf.mxu0
        %v268 = vadd.f32 0.0, %v267
        %269 = vdwg.mxu0
        %v270 = vmax.f32 %v268, 0.0
        %272 = vrot.lane.b32.xlu0 %v270, 113
        %v273 = vpop.permute.xlu0 %272
        %275 = vrot.lane.b32.xlu0 %v270, 1
        %v276 = vpop.permute.xlu0 %275
        %278 = vrot.lane.b32.xlu0 %v270, 17
        %v279 = vpop.permute.xlu0 %278
        %v281 = vsel %vm185, %v273, %v276
        %v282 = vsel %vm187, %v281, %v279
        %284 = vrot.lane.b32.xlu0 %v282, 127
        %v285 = vpop.permute.xlu0 %284
        %287 = vrot.lane.b32.xlu0 %v282, 126
        %v288 = vpop.permute.xlu0 %287
        %s290 = scalar_lea.vmem [#allocation5], 16
        %v291 = vld [vmem:[%s290] sm:$0xff]
        %v293 = vsel %vm197, %v291, 0
        %295 = vmatpush.msra.mxu0 0.0
        %296 = vmatpush.msra.mxu0 0.0
        %297 = vmatpush.msra.mxu0 0.0
        %298 = vmatpush.msra.mxu0 0.0
        %299 = vmatpush.msra.mxu0 0.0
        %300 = vmatpush.msra.mxu0 0.0
        %301 = vmatpush.msra.mxu0 0.0
        %302 = vmatpush.msra.mxu0 0.0
        %303 = vmatpush.msra.mxu0 0.0
        %304 = vmatpush.msra.mxu0 0.0
        %305 = vmatpush.msra.mxu0 0.0
        %306 = vmatpush.msra.mxu0 0.0
        %307 = vmatpush.msra.mxu0 %v203
        %308 = vmatpush.msra.mxu0 %v288
        %309 = vmatpush.msra.mxu0 %v285
        %310 = vmatpush.msra.mxu0 %v282
        %311 = vmatmul.f32.gmra.mxu0 %v293
        %v312 = vpop.f32.mrf.mxu0
        %v313 = vadd.f32 0.0, %v312
        %314 = vdwg.mxu0
        %v315 = vmax.f32 %v313, 0.0
        %317 = vrot.lane.b32.xlu0 %v315, 113
        %v318 = vpop.permute.xlu0 %317
        %320 = vrot.lane.b32.xlu0 %v315, 1
        %v321 = vpop.permute.xlu0 %320
        %323 = vrot.lane.b32.xlu0 %v315, 17
        %v324 = vpop.permute.xlu0 %323
        %v326 = vsel %vm185, %v318, %v321
        %v327 = vsel %vm187, %v326, %v324
        %329 = vrot.lane.b32.xlu0 %v327, 127
        %v330 = vpop.permute.xlu0 %329
        %332 = vrot.lane.b32.xlu0 %v327, 126
        %v333 = vpop.permute.xlu0 %332
        %s335 = scalar_lea.vmem [#allocation5], 24
        %v336 = vld [vmem:[%s335] sm:$0xff]
        %v338 = vsel %vm197, %v336, 0
        %340 = vmatpush.msra.mxu0 0.0
        %341 = vmatpush.msra.mxu0 0.0
        %342 = vmatpush.msra.mxu0 0.0
        %343 = vmatpush.msra.mxu0 0.0
        %344 = vmatpush.msra.mxu0 0.0
        %345 = vmatpush.msra.mxu0 0.0
        %346 = vmatpush.msra.mxu0 0.0
        %347 = vmatpush.msra.mxu0 0.0
        %348 = vmatpush.msra.mxu0 0.0
        %349 = vmatpush.msra.mxu0 0.0
        %350 = vmatpush.msra.mxu0 0.0
        %351 = vmatpush.msra.mxu0 0.0
        %352 = vmatpush.msra.mxu0 %v203
        %353 = vmatpush.msra.mxu0 %v333
        %354 = vmatpush.msra.mxu0 %v330
        %355 = vmatpush.msra.mxu0 %v327
        %356 = vmatmul.f32.gmra.mxu0 %v338
        %v357 = vpop.f32.mrf.mxu0
        %v358 = vadd.f32 0.0, %v357
        %359 = vdwg.mxu0
        %v360 = vmax.f32 %v358, 0.0
        %362 = vrot.lane.b32.xlu0 %v360, 113
        %v363 = vpop.permute.xlu0 %362
        %365 = vrot.lane.b32.xlu0 %v360, 1
        %v366 = vpop.permute.xlu0 %365
        %368 = vrot.lane.b32.xlu0 %v360, 17
        %v369 = vpop.permute.xlu0 %368
        %v371 = vsel %vm185, %v363, %v366
        %v372 = vsel %vm187, %v371, %v369
        %374 = vrot.lane.b32.xlu0 %v372, 127
        %v375 = vpop.permute.xlu0 %374
        %377 = vrot.lane.b32.xlu0 %v372, 126
        %v378 = vpop.permute.xlu0 %377
        %s380 = scalar_lea.vmem [#allocation5], 32
        %v381 = vld [vmem:[%s380] sm:$0xff]
        %v383 = vsel %vm197, %v381, 0
        %385 = vmatpush.msra.mxu0 0.0
        %386 = vmatpush.msra.mxu0 0.0
        %387 = vmatpush.msra.mxu0 0.0
        %388 = vmatpush.msra.mxu0 0.0
        %389 = vmatpush.msra.mxu0 0.0
        %390 = vmatpush.msra.mxu0 0.0
        %391 = vmatpush.msra.mxu0 0.0
        %392 = vmatpush.msra.mxu0 0.0
        %393 = vmatpush.msra.mxu0 0.0
        %394 = vmatpush.msra.mxu0 0.0
        %395 = vmatpush.msra.mxu0 0.0
        %396 = vmatpush.msra.mxu0 0.0
        %397 = vmatpush.msra.mxu0 %v203
        %398 = vmatpush.msra.mxu0 %v378
        %399 = vmatpush.msra.mxu0 %v375
        %400 = vmatpush.msra.mxu0 %v372
        %401 = vmatmul.f32.gmra.mxu0 %v383
        %v402 = vpop.f32.mrf.mxu0
        %v403 = vadd.f32 0.0, %v402
        %404 = vdwg.mxu0
        %v405 = vmax.f32 %v403, 0.0
        %407 = vrot.lane.b32.xlu0 %v405, 113
        %v408 = vpop.permute.xlu0 %407
        %410 = vrot.lane.b32.xlu0 %v405, 1
        %v411 = vpop.permute.xlu0 %410
        %413 = vrot.lane.b32.xlu0 %v405, 17
        %v414 = vpop.permute.xlu0 %413
        %v416 = vsel %vm185, %v408, %v411
        %v417 = vsel %vm187, %v416, %v414
        %419 = vrot.lane.b32.xlu0 %v417, 127
        %v420 = vpop.permute.xlu0 %419
        %422 = vrot.lane.b32.xlu0 %v417, 126
        %v423 = vpop.permute.xlu0 %422
        %s425 = scalar_lea.vmem [#allocation5], 40
        %v426 = vld [vmem:[%s425] sm:$0xff]
        %v428 = vsel %vm197, %v426, 0
        %430 = vmatpush.msra.mxu0 0.0
        %431 = vmatpush.msra.mxu0 0.0
        %432 = vmatpush.msra.mxu0 0.0
        %433 = vmatpush.msra.mxu0 0.0
        %434 = vmatpush.msra.mxu0 0.0
        %435 = vmatpush.msra.mxu0 0.0
        %436 = vmatpush.msra.mxu0 0.0
        %437 = vmatpush.msra.mxu0 0.0
        %438 = vmatpush.msra.mxu0 0.0
        %439 = vmatpush.msra.mxu0 0.0
        %440 = vmatpush.msra.mxu0 0.0
        %441 = vmatpush.msra.mxu0 0.0
        %442 = vmatpush.msra.mxu0 %v203
        %443 = vmatpush.msra.mxu0 %v423
        %444 = vmatpush.msra.mxu0 %v420
        %445 = vmatpush.msra.mxu0 %v417
        %446 = vmatmul.f32.gmra.mxu0 %v428
        %v447 = vpop.f32.mrf.mxu0
        %v448 = vadd.f32 0.0, %v447
        %449 = vdwg.mxu0
        %v450 = vmax.f32 %v448, 0.0
        %452 = vrot.lane.b32.xlu0 %v450, 113
        %v453 = vpop.permute.xlu0 %452
        %455 = vrot.lane.b32.xlu0 %v450, 1
        %v456 = vpop.permute.xlu0 %455
        %458 = vrot.lane.b32.xlu0 %v450, 17
        %v459 = vpop.permute.xlu0 %458
        %v461 = vsel %vm185, %v453, %v456
        %v462 = vsel %vm187, %v461, %v459
        %464 = vrot.lane.b32.xlu0 %v462, 127
        %v465 = vpop.permute.xlu0 %464
        %467 = vrot.lane.b32.xlu0 %v462, 126
        %v468 = vpop.permute.xlu0 %467
        %s470 = scalar_lea.vmem [#allocation5], 48
        %v471 = vld [vmem:[%s470] sm:$0xff]
        %v473 = vsel %vm197, %v471, 0
        %475 = vmatpush.msra.mxu0 0.0
        %476 = vmatpush.msra.mxu0 0.0
        %477 = vmatpush.msra.mxu0 0.0
        %478 = vmatpush.msra.mxu0 0.0
        %479 = vmatpush.msra.mxu0 0.0
        %480 = vmatpush.msra.mxu0 0.0
        %481 = vmatpush.msra.mxu0 0.0
        %482 = vmatpush.msra.mxu0 0.0
        %483 = vmatpush.msra.mxu0 0.0
        %484 = vmatpush.msra.mxu0 0.0
        %485 = vmatpush.msra.mxu0 0.0
        %486 = vmatpush.msra.mxu0 0.0
        %487 = vmatpush.msra.mxu0 %v203
        %488 = vmatpush.msra.mxu0 %v468
        %489 = vmatpush.msra.mxu0 %v465
        %490 = vmatpush.msra.mxu0 %v462
        %491 = vmatmul.f32.gmra.mxu0 %v473
        %v492 = vpop.f32.mrf.mxu0
        %v493 = vadd.f32 0.0, %v492
        %494 = vdwg.mxu0
        %v495 = vmax.f32 %v493, 0.0
        %497 = vrot.lane.b32.xlu0 %v495, 113
        %v498 = vpop.permute.xlu0 %497
        %500 = vrot.lane.b32.xlu0 %v495, 1
        %v501 = vpop.permute.xlu0 %500
        %503 = vrot.lane.b32.xlu0 %v495, 17
        %v504 = vpop.permute.xlu0 %503
        %v506 = vsel %vm185, %v498, %v501
        %v507 = vsel %vm187, %v506, %v504
        %509 = vrot.lane.b32.xlu0 %v507, 127
        %v510 = vpop.permute.xlu0 %509
        %512 = vrot.lane.b32.xlu0 %v507, 126
        %v513 = vpop.permute.xlu0 %512
        %s515 = scalar_lea.vmem [#allocation5], 56
        %v516 = vld [vmem:[%s515] sm:$0xff]
        %v518 = vsel %vm197, %v516, 0
        %520 = vmatpush.msra.mxu0 0.0
        %521 = vmatpush.msra.mxu0 0.0
        %522 = vmatpush.msra.mxu0 0.0
        %523 = vmatpush.msra.mxu0 0.0
        %524 = vmatpush.msra.mxu0 0.0
        %525 = vmatpush.msra.mxu0 0.0
        %526 = vmatpush.msra.mxu0 0.0
        %527 = vmatpush.msra.mxu0 0.0
        %528 = vmatpush.msra.mxu0 0.0
        %529 = vmatpush.msra.mxu0 0.0
        %530 = vmatpush.msra.mxu0 0.0
        %531 = vmatpush.msra.mxu0 0.0
        %532 = vmatpush.msra.mxu0 %v203
        %533 = vmatpush.msra.mxu0 %v513
        %534 = vmatpush.msra.mxu0 %v510
        %535 = vmatpush.msra.mxu0 %v507
        %536 = vmatmul.f32.gmra.mxu0 %v518
        %v537 = vpop.f32.mrf.mxu0
        %v538 = vadd.f32 0.0, %v537
        %539 = vdwg.mxu0
        %v540 = vmax.f32 %v538, 0.0
        %v541 = vadd.f32 %v540, %v360
        %543 = vrot.lane.b32.xlu0 %v541, 113
        %v544 = vpop.permute.xlu0 %543
        %546 = vrot.lane.b32.xlu0 %v541, 1
        %v547 = vpop.permute.xlu0 %546
        %549 = vrot.lane.b32.xlu0 %v541, 17
        %v550 = vpop.permute.xlu0 %549
        %v552 = vsel %vm185, %v544, %v547
        %v553 = vsel %vm187, %v552, %v550
        %555 = vrot.lane.b32.xlu0 %v553, 127
        %v556 = vpop.permute.xlu0 %555
        %558 = vrot.lane.b32.xlu0 %v553, 126
        %v559 = vpop.permute.xlu0 %558
        %s561 = scalar_lea.vmem [#allocation5], 64
        %v562 = vld [vmem:[%s561] sm:$0xff]
        %v564 = vsel %vm197, %v562, 0
        %566 = vmatpush.msra.mxu0 0.0
        %567 = vmatpush.msra.mxu0 0.0
        %568 = vmatpush.msra.mxu0 0.0
        %569 = vmatpush.msra.mxu0 0.0
        %570 = vmatpush.msra.mxu0 0.0
        %571 = vmatpush.msra.mxu0 0.0
        %572 = vmatpush.msra.mxu0 0.0
        %573 = vmatpush.msra.mxu0 0.0
        %574 = vmatpush.msra.mxu0 0.0
        %575 = vmatpush.msra.mxu0 0.0
        %576 = vmatpush.msra.mxu0 0.0
        %577 = vmatpush.msra.mxu0 0.0
        %578 = vmatpush.msra.mxu0 %v203
        %579 = vmatpush.msra.mxu0 %v559
        %580 = vmatpush.msra.mxu0 %v556
        %581 = vmatpush.msra.mxu0 %v553
        %582 = vmatmul.f32.gmra.mxu0 %v564
        %v583 = vpop.f32.mrf.mxu0
        %v584 = vadd.f32 0.0, %v583
        %585 = vdwg.mxu0
        %v586 = vmax.f32 %v584, 0.0
        %588 = vrot.lane.b32.xlu0 %v586, 113
        %v589 = vpop.permute.xlu0 %588
        %591 = vrot.lane.b32.xlu0 %v586, 1
        %v592 = vpop.permute.xlu0 %591
        %594 = vrot.lane.b32.xlu0 %v586, 17
        %v595 = vpop.permute.xlu0 %594
        %v597 = vsel %vm185, %v589, %v592
        %v598 = vsel %vm187, %v597, %v595
        %600 = vrot.lane.b32.xlu0 %v598, 127
        %v601 = vpop.permute.xlu0 %600
        %603 = vrot.lane.b32.xlu0 %v598, 126
        %v604 = vpop.permute.xlu0 %603
        %s606 = scalar_lea.vmem [#allocation5], 72
        %v607 = vld [vmem:[%s606] sm:$0xff]
        %v609 = vsel %vm197, %v607, 0
        %611 = vmatpush.msra.mxu0 0.0
        %612 = vmatpush.msra.mxu0 0.0
        %613 = vmatpush.msra.mxu0 0.0
        %614 = vmatpush.msra.mxu0 0.0
        %615 = vmatpush.msra.mxu0 0.0
        %616 = vmatpush.msra.mxu0 0.0
        %617 = vmatpush.msra.mxu0 0.0
        %618 = vmatpush.msra.mxu0 0.0
        %619 = vmatpush.msra.mxu0 0.0
        %620 = vmatpush.msra.mxu0 0.0
        %621 = vmatpush.msra.mxu0 0.0
        %622 = vmatpush.msra.mxu0 0.0
        %623 = vmatpush.msra.mxu0 %v203
        %624 = vmatpush.msra.mxu0 %v604
        %625 = vmatpush.msra.mxu0 %v601
        %626 = vmatpush.msra.mxu0 %v598
        %627 = vmatmul.f32.gmra.mxu0 %v609
        %v628 = vpop.f32.mrf.mxu0
        %v629 = vadd.f32 0.0, %v628
        %630 = vdwg.mxu0
        %v631 = vmax.f32 %v629, 0.0
        %v632 = vadd.f32 %v631, %v270
        %634 = vrot.lane.b32.xlu0 %v632, 113
        %v635 = vpop.permute.xlu0 %634
        %637 = vrot.lane.b32.xlu0 %v632, 1
        %v638 = vpop.permute.xlu0 %637
        %640 = vrot.lane.b32.xlu0 %v632, 17
        %v641 = vpop.permute.xlu0 %640
        %v643 = vsel %vm185, %v635, %v638
        %v644 = vsel %vm187, %v643, %v641
        %646 = vrot.lane.b32.xlu0 %v644, 127
        %v647 = vpop.permute.xlu0 %646
        %649 = vrot.lane.b32.xlu0 %v644, 126
        %v650 = vpop.permute.xlu0 %649
        %s652 = scalar_lea.vmem [#allocation5], 80
        %v653 = vld [vmem:[%s652] sm:$0xff]
        %v655 = vsel %vm197, %v653, 0
        %657 = vmatpush.msra.mxu0 0.0
        %658 = vmatpush.msra.mxu0 0.0
        %659 = vmatpush.msra.mxu0 0.0
        %660 = vmatpush.msra.mxu0 0.0
        %661 = vmatpush.msra.mxu0 0.0
        %662 = vmatpush.msra.mxu0 0.0
        %663 = vmatpush.msra.mxu0 0.0
        %664 = vmatpush.msra.mxu0 0.0
        %665 = vmatpush.msra.mxu0 0.0
        %666 = vmatpush.msra.mxu0 0.0
        %667 = vmatpush.msra.mxu0 0.0
        %668 = vmatpush.msra.mxu0 0.0
        %669 = vmatpush.msra.mxu0 %v203
        %670 = vmatpush.msra.mxu0 %v650
        %671 = vmatpush.msra.mxu0 %v647
        %672 = vmatpush.msra.mxu0 %v644
        %673 = vmatmul.f32.gmra.mxu0 %v655
        %v674 = vpop.f32.mrf.mxu0
        %v675 = vadd.f32 0.0, %v674
        %676 = vdwg.mxu0
        %v677 = vmax.f32 %v675, 0.0
        %679 = vrot.lane.b32.xlu0 %v677, 1
        %v680 = vpop.permute.xlu0 %679
        %v682 = vsel %vm185, 0.0, %v680
        %v683 = vsel %vm187, %v682, 0.0
        %685 = vrot.lane.b32.xlu0 %v683, 127
        %v686 = vpop.permute.xlu0 %685
        %688 = vrot.lane.b32.xlu0 %v683, 126
        %v689 = vpop.permute.xlu0 %688
        %s691 = scalar_lea.vmem [#allocation5], 88
        %v692 = vld [vmem:[%s691] sm:$0xff]
        %v694 = vsel %vm197, %v692, 0
        %696 = vmatpush.msra.mxu0 0.0
        %697 = vmatpush.msra.mxu0 0.0
        %698 = vmatpush.msra.mxu0 0.0
        %699 = vmatpush.msra.mxu0 0.0
        %700 = vmatpush.msra.mxu0 0.0
        %701 = vmatpush.msra.mxu0 0.0
        %702 = vmatpush.msra.mxu0 0.0
        %703 = vmatpush.msra.mxu0 0.0
        %704 = vmatpush.msra.mxu0 0.0
        %705 = vmatpush.msra.mxu0 0.0
        %706 = vmatpush.msra.mxu0 0.0
        %707 = vmatpush.msra.mxu0 0.0
        %708 = vmatpush.msra.mxu0 %v203
        %709 = vmatpush.msra.mxu0 %v689
        %710 = vmatpush.msra.mxu0 %v686
        %711 = vmatpush.msra.mxu0 %v683
        %712 = vmatmul.f32.gmra.mxu0 %v694
        %v713 = vpop.f32.mrf.mxu0
        %v714 = vadd.f32 0.0, %v713
        %715 = vdwg.mxu0
        %vm716 = vcmask 122880
        %717 = vst.msk [vmem:[%s172] sm:$0x1] %vm716, %v714
        %s718 = sand.u32 %s75, 1
        %s719 = scalar_lea.sflag [#allocation4], %s718
        %s720 = sand.u32 %s75, 1
        %s721 = scalar_lea.vmem [#allocation7], %s720
        // Predicated region
        $region37: #{fwd.1} parent=27 // pred_check
          %p722 = pneg %p85
        $region38: #{fwd.1} parent=27 // pred_check_branch
          %724 = sbr.rel (%p722) target = $region40
        $region39: #{fwd.1} parent=27 // pred_region
          %726 = vsyncadd %s719, 0
          %s727 = scalar_lea.hbm %s2, %s20
          %s729 = sshll.u32 %s721, 4
          %s730 = int_to_ptr.vmem [resolvable:$true] %s729
          %s731 = sshll.u32 %s727, 4
          %s732 = int_to_ptr.hbm [resolvable:$true] %s731
          %734 = dma.vmem_to_hbm [thread:$0]  %s730, 16, %s732, %s719
        $region40: #{fwd.1} parent=27 // pred_fallthru
          _
      $region28: #{fwd.1} parent=5 // pred_fallthru
        _
      %p735 = scmp.le.s32.totalorder 2, %s15
      // Predicated region
      $region41: #{fwd.1} parent=5 // pred_check
        %p736 = pneg %p735
      $region42: #{fwd.1} parent=5 // pred_check_branch
        %738 = sbr.rel (%p736) target = $region44
      $region43: #{fwd.1} parent=5 // pred_region
        %s739 = ssub.s32 %s15, 2
        // Predicated region
        $region45: #{fwd.1} parent=43 // pred_check
          %p740 = pneg %p91
        $region46: #{fwd.1} parent=43 // pred_check_branch
          %742 = sbr.rel (%p740) target = $region48
        $region47: #{fwd.1} parent=43 // pred_region
          %s743 = sand.u32 %s76, 1
          %s744 = scalar_lea.sflag [#allocation4], %s743
          %s745 = sand.u32 %s76, 1
          %s746 = scalar_lea.vmem [#allocation7], %s745
          %748 = dma.done %s744, 16
        $region48: #{fwd.1} parent=43 // pred_fallthru
          _
      $region44: #{fwd.1} parent=5 // pred_fallthru
        _
    $region6: #{fwd.1} parent=1 // loop_footer
      %s19 = sadd.s32 1, %s15
    $region7: #{fwd.1} parent=1 // loop_footer_branch
      %14 = sbr.rel target = $region3
    $region8: #{fwd.1} parent=1 // loop_exit
      _
    %749 = vsyncpa [#allocation3], 1
    %s750 = scalar_lea.sflag [#allocation3], 1
    %751 = vsyncpa %s750, 1
    %752 = vsyncpa [#allocation6], 1
    %753 = vsyncpa [#allocation4], 1
    %s754 = scalar_lea.sflag [#allocation4], 1
    %755 = vsyncpa %s754, 1

</llo_original>
